<compile_context>
chip_gen: v7x
topology: tpu7x:2x2x1
jax: 0.10.0
libtpu: 0.0.40
codegen_flags: <defaults>
</compile_context>

<pallas_src>
import math

import jax
import jax.numpy as jnp
from jax.experimental import pallas as pl
from jax.experimental.pallas import tpu as pltpu


def _round_up(x, m):
    return (x + m - 1) // m * m


def _pad_axis(x, axis, target):
    pad = target - x.shape[axis]
    if pad == 0:
        return x
    cfg = [(0, 0)] * x.ndim
    cfg[axis] = (0, pad)
    return jnp.pad(x, cfg)


def _critic_kernel(obs_ref, acts_ref, w1o_ref, w1a_ref, b1_ref,
                   w2_ref, b2_ref, w3_ref, b3_ref, o_ref):
    # fc1: split over obs/acts (no concatenated input anywhere), f32 accumulation.
    h = jnp.dot(obs_ref[...], w1o_ref[...], preferred_element_type=jnp.float32)
    h = h + jnp.dot(acts_ref[...], w1a_ref[...], preferred_element_type=jnp.float32)
    h = jnp.maximum(h + b1_ref[...], 0.0)                       # bias+ReLU in f32 (VPU)

    # fc2: feed low-precision operands to the MXU, accumulate in f32.
    h = jnp.dot(h.astype(w2_ref.dtype), w2_ref[...],
                preferred_element_type=jnp.float32)
    h = jnp.maximum(h + b2_ref[...], 0.0)

    # fc3 (hid -> 1): lane-axis reduction on VPU/XLU; a [*,128]@[128,1] matmul would
    # waste the MXU and still pay full result-FIFO latency.
    q = jnp.sum(h * w3_ref[...], axis=-1, keepdims=True) + b3_ref[...]
    o_ref[...] = q.astype(o_ref.dtype)


def critic_forward(obs, acts, params, *, block_b=512, compute_dtype=jnp.bfloat16):
    """Fused Critic forward. Returns q of shape [B, 1] in float32."""
    w1, b1, w2, b2, w3, b3 = params
    B, ob = obs.shape
    ac = acts.shape[1]
    hid = w1.shape[1]

    # ---- Split fc1 weight so the kernel never needs a concatenated activation. ----
    w1o, w1a = w1[:ob], w1[ob:]

    # ---- Pad tiny feature dims to the bf16 sublane pack (16). Deliberately NOT 128:
    #      that would inflate HBM reads of the dominant activation stream. ----
    SUB = 16
    ob_p, ac_p = _round_up(ob, SUB), _round_up(ac, SUB)
    obs_c = _pad_axis(obs, 1, ob_p).astype(compute_dtype)
    acts_c = _pad_axis(acts, 1, ac_p).astype(compute_dtype)
    w1o_c = _pad_axis(w1o, 0, ob_p).astype(compute_dtype)
    w1a_c = _pad_axis(w1a, 0, ac_p).astype(compute_dtype)
    w2_c = w2.astype(compute_dtype)
    b1_f = b1.astype(jnp.float32)                 # (1, hid)
    b2_f = b2.astype(jnp.float32)                 # (1, hid)
    w3_row = w3.reshape(1, hid).astype(jnp.float32)
    b3_f = b3.reshape(1, 1).astype(jnp.float32)

    # ---- Batch tiling: many grid steps -> DMA pipelining + megacore/2-TC sharding.
    #      Tile is a multiple of 16 (safe sublane multiple for both f32 and bf16). ----
    block_b = max(SUB, _round_up(min(block_b, _round_up(B, SUB)), SUB))
    Bp = _round_up(B, block_b)
    obs_c = _pad_axis(obs_c, 0, Bp)
    acts_c = _pad_axis(acts_c, 0, Bp)
    grid = (Bp // block_b,)

    full = lambda shape: pl.BlockSpec(shape, lambda i: (0, 0))   # weights stay resident

    out = pl.pallas_call(
        _critic_kernel,
        out_shape=jax.ShapeDtypeStruct((Bp, 1), jnp.float32),
        grid_spec=pltpu.PrefetchScalarGridSpec(
            num_scalar_prefetch=0,
            grid=grid,
            in_specs=[
                pl.BlockSpec((block_b, ob_p), lambda i: (i, 0)),  # obs batch tile
                pl.BlockSpec((block_b, ac_p), lambda i: (i, 0)),  # acts batch tile
                full(w1o_c.shape), full(w1a_c.shape), full(b1_f.shape),
                full(w2_c.shape), full(b2_f.shape),
                full(w3_row.shape), full(b3_f.shape),
            ],
            out_specs=pl.BlockSpec((block_b, 1), lambda i: (i, 0)),
        ),
        compiler_params=pltpu.CompilerParams(
            dimension_semantics=("parallel",),
        ),
    )(obs_c, acts_c, w1o_c, w1a_c, b1_f, w2_c, b2_f, w3_row, b3_f)

    return out[:B]


def init_critic_params(key, ob_size, ac_size, hid_size=128, dtype=jnp.float32):
    """nn.Linear-style init (U[-1/sqrt(fan_in), 1/sqrt(fan_in)]); weights [in, out]."""
    def linear(key, fan_in, fan_out):
        kw, kb = jax.random.split(key)
        bound = 1.0 / math.sqrt(fan_in)
        w = jax.random.uniform(kw, (fan_in, fan_out), dtype, -bound, bound)
        b = jax.random.uniform(kb, (1, fan_out), dtype, -bound, bound)
        return w, b

    k1, k2, k3 = jax.random.split(key, 3)
    w1, b1 = linear(k1, ob_size + ac_size, hid_size)
    w2, b2 = linear(k2, hid_size, hid_size)
    w3, b3 = linear(k3, hid_size, 1)
    return (w1, b1, w2, b2, w3, b3)


def _reference_forward(obs, acts, params):
    w1, b1, w2, b2, w3, b3 = params
    x = jnp.concatenate((obs, acts), axis=-1)
    h = jnp.maximum(x @ w1 + b1, 0.0)
    h = jnp.maximum(h @ w2 + b2, 0.0)
    return h @ w3 + b3


if __name__ == "__main__":
    B, OB, AC, HID = 8, 16, 8, 128

    key = jax.random.PRNGKey(0)
    k_obs, k_acts, k_params = jax.random.split(key, 3)

    obs = jax.random.normal(k_obs, (B, OB), jnp.float32)
    acts = jax.random.normal(k_acts, (B, AC), jnp.float32)
    params = init_critic_params(k_params, OB, AC, HID)

    q_ref = _reference_forward(obs, acts, params)

    # f32 path: faithful to the reference.
    q32 = jax.block_until_ready(
        critic_forward(obs, acts, params, compute_dtype=jnp.float32))
    assert q32.shape == (B, 1), q32.shape
    assert jnp.allclose(q32, q_ref, atol=1e-4, rtol=1e-4), (
        f"f32 max abs err {jnp.max(jnp.abs(q32 - q_ref))}")

    # bf16 path (production default: halves HBM traffic, 2x+ MXU throughput).
    qbf = jax.block_until_ready(critic_forward(obs, acts, params))
    assert qbf.shape == (B, 1), qbf.shape
    assert jnp.allclose(qbf, q_ref, atol=5e-2, rtol=5e-2), (
        f"bf16 max abs err {jnp.max(jnp.abs(qbf - q_ref))}")

    # Multi-tile grid (batch padding + >1 grid steps exercised).
    B2 = 40
    obs2 = jax.random.normal(jax.random.PRNGKey(1), (B2, OB), jnp.float32)
    acts2 = jax.random.normal(jax.random.PRNGKey(2), (B2, AC), jnp.float32)
    q2 = jax.block_until_ready(
        critic_forward(obs2, acts2, params, block_b=16, compute_dtype=jnp.float32))
    q2_ref = _reference_forward(obs2, acts2, params)
    assert q2.shape == (B2, 1), q2.shape
    assert jnp.allclose(q2, q2_ref, atol=1e-4, rtol=1e-4), (
        f"tiled max abs err {jnp.max(jnp.abs(q2 - q2_ref))}")

    print("KERNEL_OK")
</pallas_src>

<mosaic_0001>
module attributes {stable_mosaic.version = 11 : i64} {
  func.func @_critic_kernel(%arg0: i32, %arg1: memref<16x16xf32, #tpu.memory_space<vmem>>, %arg2: memref<16x16xf32, #tpu.memory_space<vmem>>, %arg3: memref<16x128xf32, #tpu.memory_space<vmem>>, %arg4: memref<16x128xf32, #tpu.memory_space<vmem>>, %arg5: memref<1x128xf32, #tpu.memory_space<vmem>>, %arg6: memref<128x128xf32, #tpu.memory_space<vmem>>, %arg7: memref<1x128xf32, #tpu.memory_space<vmem>>, %arg8: memref<1x128xf32, #tpu.memory_space<vmem>>, %arg9: memref<1x1xf32, #tpu.memory_space<vmem>>, %arg10: memref<16x1xf32, #tpu.memory_space<vmem>>) attributes {dimension_semantics = [#tpu.dimension_semantics<parallel>], iteration_bounds = array<i64: 1>, scalar_prefetch = 0 : i64, scratch_operands = 0 : i64, tpu.core_type = #tpu.core_type<tc>, window_params = [{transform_indices = @transform_0, window_bounds = array<i64: 16, 16>}, {transform_indices = @transform_1, window_bounds = array<i64: 16, 16>}, {pipeline_mode = #tpu.pipeline_mode<synchronous>, transform_indices = @transform_2, window_bounds = array<i64: 16, 128>}, {pipeline_mode = #tpu.pipeline_mode<synchronous>, transform_indices = @transform_3, window_bounds = array<i64: 16, 128>}, {pipeline_mode = #tpu.pipeline_mode<synchronous>, transform_indices = @transform_4, window_bounds = array<i64: 1, 128>}, {pipeline_mode = #tpu.pipeline_mode<synchronous>, transform_indices = @transform_5, window_bounds = array<i64: 128, 128>}, {pipeline_mode = #tpu.pipeline_mode<synchronous>, transform_indices = @transform_6, window_bounds = array<i64: 1, 128>}, {pipeline_mode = #tpu.pipeline_mode<synchronous>, transform_indices = @transform_7, window_bounds = array<i64: 1, 128>}, {pipeline_mode = #tpu.pipeline_mode<synchronous>, transform_indices = @transform_8, window_bounds = array<i64: 1, 1>}, {transform_indices = @transform_9, window_bounds = array<i64: 16, 1>}]} {
    %c0 = arith.constant 0 : index
    %c0_0 = arith.constant 0 : index
    %0 = vector.load %arg1[%c0, %c0_0] : memref<16x16xf32, #tpu.memory_space<vmem>>, vector<16x16xf32>
    %c0_1 = arith.constant 0 : index
    %c0_2 = arith.constant 0 : index
    %1 = vector.load %arg3[%c0_1, %c0_2] : memref<16x128xf32, #tpu.memory_space<vmem>>, vector<16x128xf32>
    %cst = arith.constant dense<0.000000e+00> : vector<16x128xf32>
    %2 = tpu.matmul %0, %1, %cst {dimension_numbers = #tpu.dot_dimension_numbers<[1], [0], [0], [1], [0, 0, 1, 1], [], []>} : vector<16x16xf32>, vector<16x128xf32>, vector<16x128xf32> -> vector<16x128xf32>
    %c0_3 = arith.constant 0 : index
    %c0_4 = arith.constant 0 : index
    %3 = vector.load %arg2[%c0_3, %c0_4] : memref<16x16xf32, #tpu.memory_space<vmem>>, vector<16x16xf32>
    %c0_5 = arith.constant 0 : index
    %c0_6 = arith.constant 0 : index
    %4 = vector.load %arg4[%c0_5, %c0_6] : memref<16x128xf32, #tpu.memory_space<vmem>>, vector<16x128xf32>
    %cst_7 = arith.constant dense<0.000000e+00> : vector<16x128xf32>
    %5 = tpu.matmul %3, %4, %cst_7 {dimension_numbers = #tpu.dot_dimension_numbers<[1], [0], [0], [1], [0, 0, 1, 1], [], []>} : vector<16x16xf32>, vector<16x128xf32>, vector<16x128xf32> -> vector<16x128xf32>
    %6 = arith.addf %2, %5 : vector<16x128xf32>
    %c0_8 = arith.constant 0 : index
    %c0_9 = arith.constant 0 : index
    %7 = vector.load %arg5[%c0_8, %c0_9] : memref<1x128xf32, #tpu.memory_space<vmem>>, vector<1x128xf32>
    %8 = vector.broadcast %7 : vector<1x128xf32> to vector<16x128xf32>
    %9 = arith.addf %6, %8 : vector<16x128xf32>
    %cst_10 = arith.constant 0.000000e+00 : f32
    %10 = vector.broadcast %cst_10 : f32 to vector<16x128xf32>
    %11 = arith.maximumf %9, %10 : vector<16x128xf32>
    %c0_11 = arith.constant 0 : index
    %c0_12 = arith.constant 0 : index
    %12 = vector.load %arg6[%c0_11, %c0_12] : memref<128x128xf32, #tpu.memory_space<vmem>>, vector<128x128xf32>
    %cst_13 = arith.constant dense<0.000000e+00> : vector<16x128xf32>
    %13 = tpu.matmul %11, %12, %cst_13 {dimension_numbers = #tpu.dot_dimension_numbers<[1], [0], [0], [1], [0, 0, 1, 1], [], []>} : vector<16x128xf32>, vector<128x128xf32>, vector<16x128xf32> -> vector<16x128xf32>
    %c0_14 = arith.constant 0 : index
    %c0_15 = arith.constant 0 : index
    %14 = vector.load %arg7[%c0_14, %c0_15] : memref<1x128xf32, #tpu.memory_space<vmem>>, vector<1x128xf32>
    %15 = vector.broadcast %14 : vector<1x128xf32> to vector<16x128xf32>
    %16 = arith.addf %13, %15 : vector<16x128xf32>
    %cst_16 = arith.constant 0.000000e+00 : f32
    %17 = vector.broadcast %cst_16 : f32 to vector<16x128xf32>
    %18 = arith.maximumf %16, %17 : vector<16x128xf32>
    %c0_17 = arith.constant 0 : index
    %c0_18 = arith.constant 0 : index
    %19 = vector.load %arg8[%c0_17, %c0_18] : memref<1x128xf32, #tpu.memory_space<vmem>>, vector<1x128xf32>
    %20 = vector.broadcast %19 : vector<1x128xf32> to vector<16x128xf32>
    %21 = arith.mulf %18, %20 : vector<16x128xf32>
    %cst_19 = arith.constant dense<0.000000e+00> : vector<16xf32>
    %22 = vector.multi_reduction <add>, %21, %cst_19 [1] : vector<16x128xf32> to vector<16xf32>
    %23 = vector.shape_cast %22 : vector<16xf32> to vector<16x1xf32>
    %c0_20 = arith.constant 0 : index
    %c0_21 = arith.constant 0 : index
    %24 = vector.load %arg9[%c0_20, %c0_21] : memref<1x1xf32, #tpu.memory_space<vmem>>, vector<1x1xf32>
    %25 = vector.broadcast %24 : vector<1x1xf32> to vector<16x1xf32>
    %26 = arith.addf %23, %25 : vector<16x1xf32>
    %c0_22 = arith.constant 0 : index
    %c0_23 = arith.constant 0 : index
    %27 = vector.load %arg10[%c0_22, %c0_23] : memref<16x1xf32, #tpu.memory_space<vmem>>, vector<16x1xf32>
    tpu.vector_store %arg10[%c0_22, %c0_23], %26 {strides = array<i32>} : memref<16x1xf32, #tpu.memory_space<vmem>>, vector<16x1xf32>,
    return
  }
  func.func @transform_0(%arg0: i32) -> (i32, i32) {
    %c0_i32 = arith.constant 0 : i32
    %c0_i32_0 = arith.constant 0 : i32
    return %arg0, %c0_i32 : i32, i32
  }
  func.func @transform_1(%arg0: i32) -> (i32, i32) {
    %c0_i32 = arith.constant 0 : i32
    %c0_i32_0 = arith.constant 0 : i32
    return %arg0, %c0_i32 : i32, i32
  }
  func.func @transform_2(%arg0: i32) -> (i32, i32) {
    %c0_i32 = arith.constant 0 : i32
    %c0_i32_0 = arith.constant 0 : i32
    %c0_i32_1 = arith.constant 0 : i32
    return %c0_i32, %c0_i32_0 : i32, i32
  }
  func.func @transform_3(%arg0: i32) -> (i32, i32) {
    %c0_i32 = arith.constant 0 : i32
    %c0_i32_0 = arith.constant 0 : i32
    %c0_i32_1 = arith.constant 0 : i32
    return %c0_i32, %c0_i32_0 : i32, i32
  }
  func.func @transform_4(%arg0: i32) -> (i32, i32) {
    %c0_i32 = arith.constant 0 : i32
    %c0_i32_0 = arith.constant 0 : i32
    %c0_i32_1 = arith.constant 0 : i32
    return %c0_i32, %c0_i32_0 : i32, i32
  }
  func.func @transform_5(%arg0: i32) -> (i32, i32) {
    %c0_i32 = arith.constant 0 : i32
    %c0_i32_0 = arith.constant 0 : i32
    %c0_i32_1 = arith.constant 0 : i32
    return %c0_i32, %c0_i32_0 : i32, i32
  }
  func.func @transform_6(%arg0: i32) -> (i32, i32) {
    %c0_i32 = arith.constant 0 : i32
    %c0_i32_0 = arith.constant 0 : i32
    %c0_i32_1 = arith.constant 0 : i32
    return %c0_i32, %c0_i32_0 : i32, i32
  }
  func.func @transform_7(%arg0: i32) -> (i32, i32) {
    %c0_i32 = arith.constant 0 : i32
    %c0_i32_0 = arith.constant 0 : i32
    %c0_i32_1 = arith.constant 0 : i32
    return %c0_i32, %c0_i32_0 : i32, i32
  }
  func.func @transform_8(%arg0: i32) -> (i32, i32) {
    %c0_i32 = arith.constant 0 : i32
    %c0_i32_0 = arith.constant 0 : i32
    %c0_i32_1 = arith.constant 0 : i32
    return %c0_i32, %c0_i32_0 : i32, i32
  }
  func.func @transform_9(%arg0: i32) -> (i32, i32) {
    %c0_i32 = arith.constant 0 : i32
    %c0_i32_0 = arith.constant 0 : i32
    return %arg0, %c0_i32 : i32, i32
  }
}

</mosaic_0001>

<llo_original>
// kernel: tpu_custom_call.1
$region0: #{tpu_custom_call.1}
  #allocation0 [shape = 'u32[]', space=smem, size = 0x4, offset = 0x4, fixed_abs, tag = 'smem constant byte address 0x4 - core index']
  #allocation1 [shape = 'u32[144,128]{1,0:T(1,128)}', space=vmem, size = 0x12000, scoped, tag = 'internal scratch']
  #allocation2 [shape = 'f32[1,1]{1,0:T(1,128)S(1)}', space=vmem, size = 0x200, scoped, tag = 'scoped memory for tpu_custom_call.1']
  %s0 = inlined_call_operand.hbm [shape: f32[16,16], index: 0, kind: input, shape index: {}]
  %s1 = inlined_call_operand.hbm [shape: f32[16,16], index: 1, kind: input, shape index: {}]
  %s2 = inlined_call_operand.hbm [shape: f32[16,128], index: 2, kind: input, shape index: {}]
  %s3 = inlined_call_operand.hbm [shape: f32[16,128], index: 3, kind: input, shape index: {}]
  %s4 = inlined_call_operand.vmem [shape: f32[1,128], index: 4, kind: input, shape index: {}]
  %s5 = inlined_call_operand.hbm [shape: f32[128,128], index: 5, kind: input, shape index: {}]
  %s6 = inlined_call_operand.vmem [shape: f32[1,128], index: 6, kind: input, shape index: {}]
  %s7 = inlined_call_operand.vmem [shape: f32[1,128], index: 7, kind: input, shape index: {}]
  %s8 = inlined_call_operand.<no memory space> [shape: f32[1,1], index: 8, kind: input, shape index: {}]
  %s9 = inlined_call_operand.vmem [shape: f32[16,1], index: 9, kind: output, shape index: {}]
  %s10 = sld [smem:[#allocation0]]
  $region66: #{tpu_custom_call.1} parent=0
    _
  %s12 = ssub.s32 1, %s10
  %s13 = scalar_select 0, %s12, %s10
  %v14 = vstv %s8
  %15 = vst [vmem:[#allocation2] sm:$0x1] %v14
  $region1: #{tpu_custom_call.1} parent=0
    #allocation3 [shape = 'u8[8192]{0}', space=vmem, size = 0x2000, scoped, tag = 'input window, operand 0, single buffered']
    #allocation4 [shape = 's32[1]{0}', space=sflag, size = 0x4, scoped, tag = 'scoped memory for tpu_custom_call.1']
    #allocation5 [shape = 'u8[8192]{0}', space=vmem, size = 0x2000, scoped, tag = 'input window, operand 1, single buffered']
    #allocation6 [shape = 's32[1]{0}', space=sflag, size = 0x4, scoped, tag = 'scoped memory for tpu_custom_call.1']
    #allocation7 [shape = 'u8[8192]{0}', space=vmem, size = 0x2000, scoped, tag = 'input window, operand 2, single buffered']
    #allocation8 [shape = 'u8[8192]{0}', space=vmem, size = 0x2000, scoped, tag = 'input window, operand 3, single buffered']
    #allocation9 [shape = 's32[1]{0}', space=sflag, size = 0x4, scoped, tag = 'scoped memory for tpu_custom_call.1']
    #allocation10 [shape = 'u8[65536]{0}', space=vmem, size = 0x10000, scoped, tag = 'input window, operand 5, single buffered']
    %16 = vsyncpa [#allocation4], 0
    %17 = vsyncpa [#allocation6], 0
    %18 = vsyncpa [#allocation9], 0
    // Predicated region
    $region2: #{tpu_custom_call.1} parent=1 // pred_check
      _
    $region3: #{tpu_custom_call.1} parent=1 // pred_check_branch
      %20 = sbr.rel (0) target = $region5
    $region4: #{tpu_custom_call.1} parent=1 // pred_region
      %s22 = ssub.s32 256, 256
      %23 = vsyncadd [#allocation4], %s22
      %s24 = sshll.u32 [#allocation3], 4
      %s25 = int_to_ptr.vmem [resolvable:$true] %s24
      %30 = dma.hbm_to_vmem [thread:$0]  %s0, 256, %s25, [#allocation4], 128, 128, 8
    $region5: #{tpu_custom_call.1} parent=1 // pred_fallthru
      _
    // Predicated region
    $region6: #{tpu_custom_call.1} parent=1 // pred_check
      _
    $region7: #{tpu_custom_call.1} parent=1 // pred_check_branch
      %32 = sbr.rel (0) target = $region9
    $region8: #{tpu_custom_call.1} parent=1 // pred_region
      %s34 = ssub.s32 256, 256
      %35 = vsyncadd [#allocation6], %s34
      %s36 = sshll.u32 [#allocation5], 4
      %s37 = int_to_ptr.vmem [resolvable:$true] %s36
      %42 = dma.hbm_to_vmem [thread:$0]  %s1, 256, %s37, [#allocation6], 128, 128, 8
    $region9: #{tpu_custom_call.1} parent=1 // pred_fallthru
      _
    // Predicated region
    $region10: #{tpu_custom_call.1} parent=1 // pred_check
      _
    $region11: #{tpu_custom_call.1} parent=1 // pred_check_branch
      %44 = sbr.rel (0) target = $region13
    $region12: #{tpu_custom_call.1} parent=1 // pred_region
      %s46 = ssub.s32 256, 256
      %47 = vsyncadd [#allocation6], %s46
      %s48 = sshll.u32 [#allocation7], 4
      %s49 = int_to_ptr.vmem [resolvable:$true] %s48
      %54 = dma.hbm_to_vmem [thread:$0]  %s2, 256, %s49, [#allocation6], 128, 128, 8
    $region13: #{tpu_custom_call.1} parent=1 // pred_fallthru
      _
    // Predicated region
    $region14: #{tpu_custom_call.1} parent=1 // pred_check
      _
    $region15: #{tpu_custom_call.1} parent=1 // pred_check_branch
      %56 = sbr.rel (0) target = $region17
    $region16: #{tpu_custom_call.1} parent=1 // pred_region
      %s58 = ssub.s32 256, 256
      %59 = vsyncadd [#allocation9], %s58
      %s60 = sshll.u32 [#allocation8], 4
      %s61 = int_to_ptr.vmem [resolvable:$true] %s60
      %66 = dma.hbm_to_vmem [thread:$0]  %s3, 256, %s61, [#allocation9], 128, 128, 8
    $region17: #{tpu_custom_call.1} parent=1 // pred_fallthru
      _
    // Predicated region
    $region18: #{tpu_custom_call.1} parent=1 // pred_check
      _
    $region19: #{tpu_custom_call.1} parent=1 // pred_check_branch
      %68 = sbr.rel (0) target = $region21
    $region20: #{tpu_custom_call.1} parent=1 // pred_region
      _
    $region21: #{tpu_custom_call.1} parent=1 // pred_fallthru
      _
    // Predicated region
    $region22: #{tpu_custom_call.1} parent=1 // pred_check
      _
    $region23: #{tpu_custom_call.1} parent=1 // pred_check_branch
      %70 = sbr.rel (0) target = $region25
    $region24: #{tpu_custom_call.1} parent=1 // pred_region
      %s72 = ssub.s32 2048, 2048
      %73 = vsyncadd [#allocation9], %s72
      %s74 = sshll.u32 [#allocation10], 4
      %s75 = int_to_ptr.vmem [resolvable:$true] %s74
      %80 = dma.hbm_to_vmem [thread:$0]  %s5, 2048, %s75, [#allocation9], 128, 128, 8
    $region25: #{tpu_custom_call.1} parent=1 // pred_fallthru
      _
    // Predicated region
    $region26: #{tpu_custom_call.1} parent=1 // pred_check
      _
    $region27: #{tpu_custom_call.1} parent=1 // pred_check_branch
      %82 = sbr.rel (0) target = $region29
    $region28: #{tpu_custom_call.1} parent=1 // pred_region
      _
    $region29: #{tpu_custom_call.1} parent=1 // pred_fallthru
      _
    // Predicated region
    $region30: #{tpu_custom_call.1} parent=1 // pred_check
      _
    $region31: #{tpu_custom_call.1} parent=1 // pred_check_branch
      %84 = sbr.rel (0) target = $region33
    $region32: #{tpu_custom_call.1} parent=1 // pred_region
      _
    $region33: #{tpu_custom_call.1} parent=1 // pred_fallthru
      _
    // Predicated region
    $region34: #{tpu_custom_call.1} parent=1 // pred_check
      _
    $region35: #{tpu_custom_call.1} parent=1 // pred_check_branch
      %86 = sbr.rel (0) target = $region37
    $region36: #{tpu_custom_call.1} parent=1 // pred_region
      _
    $region37: #{tpu_custom_call.1} parent=1 // pred_fallthru
      _
    // Predicated region
    $region38: #{tpu_custom_call.1} parent=1 // pred_check
      _
    $region39: #{tpu_custom_call.1} parent=1 // pred_check_branch
      %88 = sbr.rel (0) target = $region41
    $region40: #{tpu_custom_call.1} parent=1 // pred_region
      %89 = dma.done [#allocation4], 256
    $region41: #{tpu_custom_call.1} parent=1 // pred_fallthru
      _
    // Predicated region
    $region42: #{tpu_custom_call.1} parent=1 // pred_check
      _
    $region43: #{tpu_custom_call.1} parent=1 // pred_check_branch
      %91 = sbr.rel (0) target = $region45
    $region44: #{tpu_custom_call.1} parent=1 // pred_region
      %92 = dma.done [#allocation6], 256
    $region45: #{tpu_custom_call.1} parent=1 // pred_fallthru
      _
    // Predicated region
    $region46: #{tpu_custom_call.1} parent=1 // pred_check
      _
    $region47: #{tpu_custom_call.1} parent=1 // pred_check_branch
      %94 = sbr.rel (0) target = $region49
    $region48: #{tpu_custom_call.1} parent=1 // pred_region
      %95 = dma.done [#allocation6], 256
    $region49: #{tpu_custom_call.1} parent=1 // pred_fallthru
      _
    // Predicated region
    $region50: #{tpu_custom_call.1} parent=1 // pred_check
      _
    $region51: #{tpu_custom_call.1} parent=1 // pred_check_branch
      %97 = sbr.rel (0) target = $region53
    $region52: #{tpu_custom_call.1} parent=1 // pred_region
      %98 = dma.done [#allocation9], 256
    $region53: #{tpu_custom_call.1} parent=1 // pred_fallthru
      _
    // Predicated region
    $region54: #{tpu_custom_call.1} parent=1 // pred_check
      _
    $region55: #{tpu_custom_call.1} parent=1 // pred_check_branch
      %100 = sbr.rel (0) target = $region57
    $region56: #{tpu_custom_call.1} parent=1 // pred_region
      %101 = dma.done [#allocation9], 2048
    $region57: #{tpu_custom_call.1} parent=1 // pred_fallthru
      _
    %v102 = vld [vmem:[#allocation3] sm:$0xff]
    %v103 = vld [vmem:[#allocation3 + $0x8] sm:$0xff]
    %v104 = vld [vmem:[#allocation7] sm:$0xff]
    %v105 = vld [vmem:[#allocation7 + $0x8] sm:$0xff]
    %v106 = vld [vmem:[#allocation5] sm:$0xff]
    %v107 = vld [vmem:[#allocation5 + $0x8] sm:$0xff]
    %v108 = vld [vmem:[#allocation8] sm:$0xff]
    %v109 = vld [vmem:[#allocation8 + $0x8] sm:$0xff]
    %vm110 = vcmask 130048
    %v112 = vsel %vm110, %v106, 0
    %v115 = vsel %vm110, %v107, 0
    %117 = vmatprep.subr.mxu0 0.0
    %118 = vmatpush1.msra.mxu0 %v108
    %119 = vmatprep.subr.mxu0 0.0
    %120 = vmatpush1.msra.mxu0 %v109
    %121 = vmatprep.subr.mxu0 0.0
    %122 = vmatpush1.msra.mxu0 0.0
    %123 = vmatprep.subr.mxu0 0.0
    %124 = vmatpush1.msra.mxu0 0.0
    %125 = vmatprep.subr.mxu0 0.0
    %126 = vmatpush1.msra.mxu0 0.0
    %127 = vmatprep.subr.mxu0 0.0
    %128 = vmatpush1.msra.mxu0 0.0
    %129 = vmatprep.subr.mxu0 0.0
    %130 = vmatpush1.msra.mxu0 0.0
    %131 = vmatprep.subr.mxu0 0.0
    %132 = vmatpush1.msra.mxu0 0.0
    %133 = vmatprep.subr.mxu0 0.0
    %134 = vmatpush1.msra.mxu0 0.0
    %135 = vmatprep.subr.mxu0 0.0
    %136 = vmatpush1.msra.mxu0 0.0
    %137 = vmatprep.subr.mxu0 0.0
    %138 = vmatpush1.msra.mxu0 0.0
    %139 = vmatprep.subr.mxu0 0.0
    %140 = vmatpush1.msra.mxu0 0.0
    %141 = vmatprep.subr.mxu0 0.0
    %142 = vmatpush1.msra.mxu0 0.0
    %143 = vmatprep.subr.mxu0 0.0
    %144 = vmatpush1.msra.mxu0 0.0
    %145 = vmatprep.subr.mxu0 0.0
    %146 = vmatpush1.msra.mxu0 0.0
    %147 = vmatprep.subr.mxu0 0.0
    %148 = vmatpush1.msra.mxu0 0.0
    %149 = vmatprep.subr.mxu0 0.0
    %150 = vmatpush1.msra.mxu0 0.0
    %151 = vmatprep.subr.mxu0 0.0
    %152 = vmatpush1.msra.mxu0 0.0
    %153 = vmatprep.subr.mxu0 0.0
    %154 = vmatpush1.msra.mxu0 0.0
    %155 = vmatprep.subr.mxu0 0.0
    %156 = vmatpush1.msra.mxu0 0.0
    %157 = vmatprep.subr.mxu0 0.0
    %158 = vmatpush1.msra.mxu0 0.0
    %159 = vmatprep.subr.mxu0 0.0
    %160 = vmatpush1.msra.mxu0 0.0
    %161 = vmatprep.subr.mxu0 0.0
    %162 = vmatpush1.msra.mxu0 0.0
    %163 = vmatprep.subr.mxu0 0.0
    %164 = vmatpush1.msra.mxu0 0.0
    %165 = vmatprep.subr.mxu0 0.0
    %166 = vmatpush1.msra.mxu0 0.0
    %167 = vmatprep.subr.mxu0 0.0
    %168 = vmatpush1.msra.mxu0 0.0
    %169 = vmatprep.subr.mxu0 0.0
    %170 = vmatpush1.msra.mxu0 0.0
    %171 = vmatprep.subr.mxu0 0.0
    %172 = vmatpush1.msra.mxu0 0.0
    %173 = vmatprep.subr.mxu0 0.0
    %174 = vmatpush1.msra.mxu0 0.0
    %175 = vmatprep.subr.mxu0 0.0
    %176 = vmatpush1.msra.mxu0 0.0
    %177 = vmatprep.subr.mxu0 0.0
    %178 = vmatpush1.msra.mxu0 0.0
    %179 = vmatprep.subr.mxu0 0.0
    %180 = vmatpush1.msra.mxu0 0.0
    %181 = vmatprep.mubr.f32.mxu0 0.0
    %182 = vmatmul.mubr.f32.gmra.mrb[0].mxu0 %v112
    %v183 = vpop.f32.mrb[0].mxu0
    %v184 = vadd.f32 0.0, %v183
    %v185 = vpop.f32.mrb[0].mxu0
    %186 = vmatprep.mubr.f32.mxu0 0.0
    %187 = vmatmul.mubr.f32.gmra.mrb[0].mxu0 %v115
    %v188 = vpop.f32.mrb[0].mxu0
    %v189 = vadd.f32 0.0, %v188
    %v190 = vpop.f32.mrb[0].mxu0
    %191 = vdwg.mxu0
    %v193 = vsel %vm110, %v102, 0
    %v196 = vsel %vm110, %v103, 0
    %198 = vmatprep.subr.mxu0 0.0
    %199 = vmatpush1.msra.mxu0 %v104
    %200 = vmatprep.subr.mxu0 0.0
    %201 = vmatpush1.msra.mxu0 %v105
    %202 = vmatprep.subr.mxu0 0.0
    %203 = vmatpush1.msra.mxu0 0.0
    %204 = vmatprep.subr.mxu0 0.0
    %205 = vmatpush1.msra.mxu0 0.0
    %206 = vmatprep.subr.mxu0 0.0
    %207 = vmatpush1.msra.mxu0 0.0
    %208 = vmatprep.subr.mxu0 0.0
    %209 = vmatpush1.msra.mxu0 0.0
    %210 = vmatprep.subr.mxu0 0.0
    %211 = vmatpush1.msra.mxu0 0.0
    %212 = vmatprep.subr.mxu0 0.0
    %213 = vmatpush1.msra.mxu0 0.0
    %214 = vmatprep.subr.mxu0 0.0
    %215 = vmatpush1.msra.mxu0 0.0
    %216 = vmatprep.subr.mxu0 0.0
    %217 = vmatpush1.msra.mxu0 0.0
    %218 = vmatprep.subr.mxu0 0.0
    %219 = vmatpush1.msra.mxu0 0.0
    %220 = vmatprep.subr.mxu0 0.0
    %221 = vmatpush1.msra.mxu0 0.0
    %222 = vmatprep.subr.mxu0 0.0
    %223 = vmatpush1.msra.mxu0 0.0
    %224 = vmatprep.subr.mxu0 0.0
    %225 = vmatpush1.msra.mxu0 0.0
    %226 = vmatprep.subr.mxu0 0.0
    %227 = vmatpush1.msra.mxu0 0.0
    %228 = vmatprep.subr.mxu0 0.0
    %229 = vmatpush1.msra.mxu0 0.0
    %230 = vmatprep.subr.mxu0 0.0
    %231 = vmatpush1.msra.mxu0 0.0
    %232 = vmatprep.subr.mxu0 0.0
    %233 = vmatpush1.msra.mxu0 0.0
    %234 = vmatprep.subr.mxu0 0.0
    %235 = vmatpush1.msra.mxu0 0.0
    %236 = vmatprep.subr.mxu0 0.0
    %237 = vmatpush1.msra.mxu0 0.0
    %238 = vmatprep.subr.mxu0 0.0
    %239 = vmatpush1.msra.mxu0 0.0
    %240 = vmatprep.subr.mxu0 0.0
    %241 = vmatpush1.msra.mxu0 0.0
    %242 = vmatprep.subr.mxu0 0.0
    %243 = vmatpush1.msra.mxu0 0.0
    %244 = vmatprep.subr.mxu0 0.0
    %245 = vmatpush1.msra.mxu0 0.0
    %246 = vmatprep.subr.mxu0 0.0
    %247 = vmatpush1.msra.mxu0 0.0
    %248 = vmatprep.subr.mxu0 0.0
    %249 = vmatpush1.msra.mxu0 0.0
    %250 = vmatprep.subr.mxu0 0.0
    %251 = vmatpush1.msra.mxu0 0.0
    %252 = vmatprep.subr.mxu0 0.0
    %253 = vmatpush1.msra.mxu0 0.0
    %254 = vmatprep.subr.mxu0 0.0
    %255 = vmatpush1.msra.mxu0 0.0
    %256 = vmatprep.subr.mxu0 0.0
    %257 = vmatpush1.msra.mxu0 0.0
    %258 = vmatprep.subr.mxu0 0.0
    %259 = vmatpush1.msra.mxu0 0.0
    %260 = vmatprep.subr.mxu0 0.0
    %261 = vmatpush1.msra.mxu0 0.0
    %262 = vmatprep.mubr.f32.mxu0 0.0
    %263 = vmatmul.mubr.f32.gmra.mrb[0].mxu0 %v193
    %v264 = vpop.f32.mrb[0].mxu0
    %v265 = vadd.f32 %v184, %v264
    %v266 = vpop.f32.mrb[0].mxu0
    %267 = vmatprep.mubr.f32.mxu0 0.0
    %268 = vmatmul.mubr.f32.gmra.mrb[0].mxu0 %v196
    %v269 = vpop.f32.mrb[0].mxu0
    %v270 = vadd.f32 %v189, %v269
    %v271 = vpop.f32.mrb[0].mxu0
    %272 = vdwg.mxu0
    %v273 = vld [vmem:[%s4] sm:$0x1]
    %v275 = vlaneseq
    %v276 = vshrl.u32 %v275, 7
    %v277 = vsub.s32 0, %v276
    %v278 = vrot.slane %v273, %v277
    %v280 = vadd.f32 %v265, %v278
    %v281 = vadd.f32 %v270, %v278
    %v282 = vmax.f32 %v280, 0.0
    %v283 = vmax.f32 %v281, 0.0
    %v284 = vld [vmem:[#allocation10] sm:$0xff]
    %v285 = vld [vmem:[#allocation10 + $0x8] sm:$0xff]
    %v286 = vld [vmem:[#allocation10 + $0x10] sm:$0xff]
    %v287 = vld [vmem:[#allocation10 + $0x18] sm:$0xff]
    %v288 = vld [vmem:[#allocation10 + $0x20] sm:$0xff]
    %v289 = vld [vmem:[#allocation10 + $0x28] sm:$0xff]
    %v290 = vld [vmem:[#allocation10 + $0x30] sm:$0xff]
    %v291 = vld [vmem:[#allocation10 + $0x38] sm:$0xff]
    %v292 = vld [vmem:[#allocation10 + $0x40] sm:$0xff]
    %v293 = vld [vmem:[#allocation10 + $0x48] sm:$0xff]
    %v294 = vld [vmem:[#allocation10 + $0x50] sm:$0xff]
    %v295 = vld [vmem:[#allocation10 + $0x58] sm:$0xff]
    %v296 = vld [vmem:[#allocation10 + $0x60] sm:$0xff]
    %v297 = vld [vmem:[#allocation10 + $0x68] sm:$0xff]
    %v298 = vld [vmem:[#allocation10 + $0x70] sm:$0xff]
    %v299 = vld [vmem:[#allocation10 + $0x78] sm:$0xff]
    %v300 = vld [vmem:[%s6] sm:$0x1]
    %v302 = vlaneseq
    %v303 = vshrl.u32 %v302, 7
    %v304 = vsub.s32 0, %v303
    %v305 = vrot.slane %v300, %v304
    %307 = vmatprep.subr.mxu0 0.0
    %308 = vmatpush1.msra.mxu0 %v284
    %309 = vmatprep.subr.mxu0 0.0
    %310 = vmatpush1.msra.mxu0 %v285
    %311 = vmatprep.subr.mxu0 0.0
    %312 = vmatpush1.msra.mxu0 %v286
    %313 = vmatprep.subr.mxu0 0.0
    %314 = vmatpush1.msra.mxu0 %v287
    %315 = vmatprep.subr.mxu0 0.0
    %316 = vmatpush1.msra.mxu0 %v288
    %317 = vmatprep.subr.mxu0 0.0
    %318 = vmatpush1.msra.mxu0 %v289
    %319 = vmatprep.subr.mxu0 0.0
    %320 = vmatpush1.msra.mxu0 %v290
    %321 = vmatprep.subr.mxu0 0.0
    %322 = vmatpush1.msra.mxu0 %v291
    %323 = vmatprep.subr.mxu0 0.0
    %324 = vmatpush1.msra.mxu0 %v292
    %325 = vmatprep.subr.mxu0 0.0
    %326 = vmatpush1.msra.mxu0 %v293
    %327 = vmatprep.subr.mxu0 0.0
    %328 = vmatpush1.msra.mxu0 %v294
    %329 = vmatprep.subr.mxu0 0.0
    %330 = vmatpush1.msra.mxu0 %v295
    %331 = vmatprep.subr.mxu0 0.0
    %332 = vmatpush1.msra.mxu0 %v296
    %333 = vmatprep.subr.mxu0 0.0
    %334 = vmatpush1.msra.mxu0 %v297
    %335 = vmatprep.subr.mxu0 0.0
    %336 = vmatpush1.msra.mxu0 %v298
    %337 = vmatprep.subr.mxu0 0.0
    %338 = vmatpush1.msra.mxu0 %v299
    %339 = vmatprep.subr.mxu0 0.0
    %340 = vmatpush1.msra.mxu0 0.0
    %341 = vmatprep.subr.mxu0 0.0
    %342 = vmatpush1.msra.mxu0 0.0
    %343 = vmatprep.subr.mxu0 0.0
    %344 = vmatpush1.msra.mxu0 0.0
    %345 = vmatprep.subr.mxu0 0.0
    %346 = vmatpush1.msra.mxu0 0.0
    %347 = vmatprep.subr.mxu0 0.0
    %348 = vmatpush1.msra.mxu0 0.0
    %349 = vmatprep.subr.mxu0 0.0
    %350 = vmatpush1.msra.mxu0 0.0
    %351 = vmatprep.subr.mxu0 0.0
    %352 = vmatpush1.msra.mxu0 0.0
    %353 = vmatprep.subr.mxu0 0.0
    %354 = vmatpush1.msra.mxu0 0.0
    %355 = vmatprep.subr.mxu0 0.0
    %356 = vmatpush1.msra.mxu0 0.0
    %357 = vmatprep.subr.mxu0 0.0
    %358 = vmatpush1.msra.mxu0 0.0
    %359 = vmatprep.subr.mxu0 0.0
    %360 = vmatpush1.msra.mxu0 0.0
    %361 = vmatprep.subr.mxu0 0.0
    %362 = vmatpush1.msra.mxu0 0.0
    %363 = vmatprep.subr.mxu0 0.0
    %364 = vmatpush1.msra.mxu0 0.0
    %365 = vmatprep.subr.mxu0 0.0
    %366 = vmatpush1.msra.mxu0 0.0
    %367 = vmatprep.subr.mxu0 0.0
    %368 = vmatpush1.msra.mxu0 0.0
    %369 = vmatprep.subr.mxu0 0.0
    %370 = vmatpush1.msra.mxu0 0.0
    %371 = vmatprep.mubr.f32.mxu0 0.0
    %372 = vmatmul.mubr.f32.gmra.mrb[0].mxu0 %v282
    %v373 = vpop.f32.mrb[0].mxu0
    %v374 = vadd.f32 %v305, %v373
    %v375 = vpop.f32.mrb[0].mxu0
    %376 = vmatprep.mubr.f32.mxu0 0.0
    %377 = vmatmul.mubr.f32.gmra.mrb[0].mxu0 %v283
    %v378 = vpop.f32.mrb[0].mxu0
    %v379 = vadd.f32 %v305, %v378
    %v380 = vpop.f32.mrb[0].mxu0
    %381 = vdwg.mxu0
    %v382 = vmax.f32 %v374, 0.0
    %v383 = vmax.f32 %v379, 0.0
    %v384 = vld [vmem:[%s7] sm:$0x1]
    %v386 = vlaneseq
    %v387 = vshrl.u32 %v386, 7
    %v388 = vsub.s32 0, %v387
    %v389 = vrot.slane %v384, %v388
    %v391 = vmul.f32 %v382, %v389
    %v392 = vmul.f32 %v383, %v389
    %393 = vadd.xlane.f32.xlu0 %v391
    %v394 = vpop.xlane.xlu0 %393
    %395 = vadd.xlane.f32.xlu0 %v392
    %v396 = vpop.xlane.xlu0 %395
    %v397 = vld [vmem:[#allocation2] sm:$0x1]
    %v399 = vlaneseq
    %v400 = vshrl.u32 %v399, 7
    %v401 = vsub.s32 0, %v400
    %v402 = vrot.slane %v397, %v401
    %v404 = vadd.f32 %v394, %v402
    %v405 = vadd.f32 %v396, %v402
    %vm406 = vcmask 7168
    %407 = vst.msk [vmem:[%s9] sm:$0xff] %vm406, %v404
    %408 = vst.msk [vmem:[%s9 + $0x8] sm:$0xff] %vm406, %v405
    // Predicated region
    $region58: #{tpu_custom_call.1} parent=1 // pred_check
      _
    $region59: #{tpu_custom_call.1} parent=1 // pred_check_branch
      %410 = sbr.rel (0) target = $region61
    $region60: #{tpu_custom_call.1} parent=1 // pred_region
      _
    $region61: #{tpu_custom_call.1} parent=1 // pred_fallthru
      _
    // Predicated region
    $region62: #{tpu_custom_call.1} parent=1 // pred_check
      _
    $region63: #{tpu_custom_call.1} parent=1 // pred_check_branch
      %412 = sbr.rel (0) target = $region65
    $region64: #{tpu_custom_call.1} parent=1 // pred_region
      _
    $region65: #{tpu_custom_call.1} parent=1 // pred_fallthru
      _
    %413 = vsyncpa [#allocation4], 1
    %414 = vsyncpa [#allocation6], 1
    %415 = vsyncpa [#allocation9], 1

</llo_original>
